<compile_context>
chip_gen: v6e
topology: v6e:2x2x1
jax: 0.10.0
libtpu: 0.0.40
codegen_flags: <defaults>
</compile_context>

<pallas_src>
import functools

import jax
import jax.numpy as jnp
from jax import lax
from jax.experimental import pallas as pl
from jax.experimental.pallas import tpu as pltpu


def _round_up(a, b):
    return (a + b - 1) // b * b


def _cdiv(a, b):
    return (a + b - 1) // b


def _vmem_budget_bytes():
    """Per-generation usable VMEM budget (leaves headroom for compiler scratch)."""
    try:
        cap = int(pltpu.get_tpu_info().vmem_capacity_bytes)
    except Exception:
        cap = 64 * 1024 * 1024          # conservative default (v7x per-TC VMEM)
    # ~52 MiB on a 64 MiB part (v7x), ~107 MiB on a 128 MiB part (v5e/v6e).
    return max(int(cap * 0.85) - (2 << 20), 16 << 20)


# ----------------------------------------------------------------------------
# Kernels
# ----------------------------------------------------------------------------

def _bias_relu_ln_store(acc_f32, b, gamma, beta, o_ref, *, eps, out_p, d_true):
    """Shared epilogue: bias + ReLU on both branches, product, LayerNorm, store."""
    fg = jnp.maximum(acc_f32 + b, 0.0)             # (tile_m, 2*out_p) f32
    f = fg[:, :out_p]                              # 128-aligned static lane split
    g = fg[:, out_p:]
    y = f * g                                      # padded lanes are exactly 0

    inv_d = jnp.float32(1.0 / d_true)
    mean = jnp.sum(y, axis=-1, keepdims=True) * inv_d
    # Two-pass variance (numerically stable); mask padded lanes so they do not
    # contribute (0 - mean)^2 terms.
    lane = lax.broadcasted_iota(jnp.int32, (1, out_p), 1)
    centered = jnp.where(lane < d_true, y - mean, 0.0)
    var = jnp.sum(centered * centered, axis=-1, keepdims=True) * inv_d
    y_norm = centered * lax.rsqrt(var + eps)       # EUP rsqrt path

    o_ref[...] = (y_norm * gamma + beta).astype(o_ref.dtype)


def _fl_kernel_resident(x_ref, w_ref, b_ref, gamma_ref, beta_ref, o_ref,
                        *, eps, out_p, d_true):
    # Weight fully resident in VMEM; one fused matmul for both branches.
    acc = jnp.dot(x_ref[...], w_ref[...], preferred_element_type=jnp.float32)
    _bias_relu_ln_store(acc, b_ref[...], gamma_ref[...], beta_ref[...], o_ref,
                        eps=eps, out_p=out_p, d_true=d_true)


def _fl_kernel_ktiled(x_ref, w_ref, b_ref, gamma_ref, beta_ref, o_ref, acc_ref,
                      *, eps, out_p, d_true):
    # in_dim tiled along grid axis 1; f32 accumulator lives in VMEM scratch.
    k = pl.program_id(1)

    @pl.when(k == 0)
    def _():
        acc_ref[...] = jnp.zeros_like(acc_ref)

    acc_ref[...] += jnp.dot(x_ref[...], w_ref[...],
                            preferred_element_type=jnp.float32)

    @pl.when(k == pl.num_programs(1) - 1)
    def _():
        _bias_relu_ln_store(acc_ref[...], b_ref[...], gamma_ref[...],
                            beta_ref[...], o_ref,
                            eps=eps, out_p=out_p, d_true=d_true)


# ----------------------------------------------------------------------------
# Host-side wrapper
# ----------------------------------------------------------------------------

def pack_filtered_linear_params(wf, bf, wg, bg, gamma, beta, *, param_dtype=None):
    """Pre-pack parameters ONCE (hoisted out of the per-call path).

    wf, wg: (in_dim, out_dim) -- already transposed from torch's (out, in).
    param_dtype: optionally cast the fused weight (e.g. jnp.bfloat16, matched
    to the activation dtype) for higher MXU throughput.
    """
    in_dim, out_dim = wf.shape
    out_p = _round_up(out_dim, 128)                # lane-dense store width
    pad_c = out_p - out_dim

    w_cat = jnp.concatenate(
        [jnp.pad(wf, ((0, 0), (0, pad_c))),
         jnp.pad(wg, ((0, 0), (0, pad_c)))], axis=1)            # (in_dim, 2*out_p)
    if param_dtype is not None:
        w_cat = w_cat.astype(param_dtype)
    b_cat = jnp.concatenate(
        [jnp.pad(bf, (0, pad_c)), jnp.pad(bg, (0, pad_c))]
    ).astype(jnp.float32).reshape(1, 2 * out_p)
    gamma_p = jnp.pad(gamma, (0, pad_c)).astype(jnp.float32).reshape(1, out_p)
    beta_p = jnp.pad(beta, (0, pad_c)).astype(jnp.float32).reshape(1, out_p)

    return dict(w_cat=w_cat, b_cat=b_cat, gamma=gamma_p, beta=beta_p,
                in_dim=in_dim, out_dim=out_dim, out_p=out_p)


def filtered_linear(x, params, *, eps=1e-5):
    """x: (batch, seq, in_dim) -> (batch, seq, out_dim)."""
    B, S, in_dim = x.shape
    assert in_dim == params["in_dim"]
    out_dim, out_p = params["out_dim"], params["out_p"]
    w_cat, b_cat = params["w_cat"], params["b_cat"]
    gamma_p, beta_p = params["gamma"], params["beta"]

    N = B * S
    x2 = x.reshape(N, in_dim)

    x_bytes = jnp.dtype(x.dtype).itemsize
    w_bytes = jnp.dtype(w_cat.dtype).itemsize
    out_bytes = x_bytes
    sub = {1: 32, 2: 16, 4: 8}.get(x_bytes, 8)     # dtype-native sublane multiple

    budget = _vmem_budget_bytes()
    w_resident_bytes = in_dim * 2 * out_p * w_bytes
    use_ktiling = w_resident_bytes > int(0.4 * budget)

    def adjust_tile_m(tm):
        # Clip to the problem size, keep a sublane multiple.
        if N < tm:
            tm = max(sub, _round_up(N, sub))
        # Ensure >= 2 row-grid steps so the "parallel" axis can shard across
        # v7x's 2 TensorCores (no-op when N is tiny).
        if _cdiv(N, tm) < 2 and N > sub:
            tm = max(sub, _round_up(_cdiv(N, 2), sub))
        return tm

    if not use_ktiling:
        # ---------------- weight-resident path -------------------------------
        def need_fn(tm):
            return (w_resident_bytes                      # single-buffered weight
                    + 2 * tm * in_dim * x_bytes           # x blocks (double-buffered)
                    + 2 * tm * out_p * out_bytes          # out blocks (double-buffered)
                    + 3 * tm * out_p * 4                  # f32 matmul result / epilogue slabs
                    + (1 << 20))                          # internal-scratch allowance

        tile_m = 128
        for cand in (1024, 512, 256, 128):                # 128-multiples (MXU friendly)
            if need_fn(cand) <= budget:
                tile_m = cand
                break
        tile_m = adjust_tile_m(tile_m)
        need = need_fn(tile_m)

        grid = (_cdiv(N, tile_m),)                        # last block may be partial
        dims = ("parallel",)
        kernel = functools.partial(_fl_kernel_resident,
                                   eps=eps, out_p=out_p, d_true=out_dim)
        operands = (x2, w_cat, b_cat, gamma_p, beta_p)
        scratch = ()

        def build_specs(const):
            in_specs = [
                pl.BlockSpec((tile_m, in_dim), lambda i: (i, 0)),     # x rows
                const((in_dim, 2 * out_p)),                           # [wf|wg]
                const((1, 2 * out_p)),                                # [bf|bg]
                const((1, out_p)),                                    # gamma
                const((1, out_p)),                                    # beta
            ]
            out_specs = pl.BlockSpec((tile_m, out_p), lambda i: (i, 0))
            return in_specs, out_specs
    else:
        # ---------------- K-tiled path (large in_dim) -------------------------
        def need_fn(tm, tk):
            return (2 * tm * tk * x_bytes                 # x blocks (double-buffered)
                    + 2 * tk * 2 * out_p * w_bytes        # weight blocks (double-buffered)
                    + tm * 2 * out_p * 4                  # f32 accumulator scratch
                    + 2 * tm * out_p * out_bytes          # out blocks
                    + 2 * tm * out_p * 4                  # epilogue temporaries
                    + (1 << 20))

        tile_m, tile_k = 128, 128
        in_dim_cap = _round_up(in_dim, 128)
        found = False
        for tm in (512, 256, 128):
            for tk in (2048, 1024, 512, 256, 128):
                tk_c = min(tk, in_dim_cap)
                if need_fn(tm, tk_c) <= budget:
                    tile_m, tile_k = tm, tk_c
                    found = True
                    break
            if found:
                break
        tile_m = adjust_tile_m(tile_m)
        need = need_fn(tile_m, tile_k)

        in_dim_p = _round_up(in_dim, tile_k)
        if in_dim_p != in_dim:
            # TODO(synk): pre-pack the zero-padded weight for a fixed tile_k to
            # avoid this per-call pad of x / w_cat on the K-tiled path.
            x2 = jnp.pad(x2, ((0, 0), (0, in_dim_p - in_dim)))
            w_cat = jnp.pad(w_cat, ((0, in_dim_p - in_dim), (0, 0)))

        grid = (_cdiv(N, tile_m), in_dim_p // tile_k)
        dims = ("parallel", "arbitrary")
        kernel = functools.partial(_fl_kernel_ktiled,
                                   eps=eps, out_p=out_p, d_true=out_dim)
        operands = (x2, w_cat, b_cat, gamma_p, beta_p)
        scratch = (pltpu.VMEM((tile_m, 2 * out_p), jnp.float32),)

        def build_specs(const):
            in_specs = [
                pl.BlockSpec((tile_m, tile_k), lambda i, k: (i, k)),      # x
                pl.BlockSpec((tile_k, 2 * out_p), lambda i, k: (k, 0)),   # [wf|wg] K-slab
                const((1, 2 * out_p)),                                    # [bf|bg]
                const((1, out_p)),                                        # gamma
                const((1, out_p)),                                        # beta
            ]
            out_specs = pl.BlockSpec((tile_m, out_p), lambda i, k: (i, 0))
            return in_specs, out_specs

    # Per-generation VMEM limit (not hard-capped at 64 MiB on v5e/v6e).
    vmem_limit = int(min(max(2 * need, 32 << 20), budget))

    def run(single_buffer_invariants):
        if single_buffer_invariants:
            def const(shape):
                # Grid-invariant operand: single-buffer it (constant index_map),
                # halving its VMEM footprint.
                return pl.BlockSpec(shape, lambda *_: (0,) * len(shape),
                                    pipeline_mode=pl.Buffered(1))
        else:
            def const(shape):
                return pl.BlockSpec(shape, lambda *_: (0,) * len(shape))

        in_specs, out_specs = build_specs(const)
        return pl.pallas_call(
            kernel,
            out_shape=jax.ShapeDtypeStruct((N, out_p), x.dtype),
            grid_spec=pltpu.PrefetchScalarGridSpec(
                num_scalar_prefetch=0,
                grid=grid,
                in_specs=in_specs,
                out_specs=out_specs,
                scratch_shapes=list(scratch)),
            compiler_params=pltpu.CompilerParams(
                dimension_semantics=dims,
                vmem_limit_bytes=vmem_limit),
        )(*operands)

    try:
        out2 = run(True)
    except Exception:
        # pipeline_mode / pl.Buffered(1) unsupported on this jax version:
        # fall back to default double-buffering of the invariant operands.
        out2 = run(False)

    return out2[:, :out_dim].reshape(B, S, out_dim)


# ----------------------------------------------------------------------------
# Reference + test
# ----------------------------------------------------------------------------

def _reference(x, wf, bf, wg, bg, gamma, beta, eps=1e-5):
    f = jnp.maximum(x @ wf + bf, 0.0)
    g = jnp.maximum(x @ wg + bg, 0.0)
    y = f * g
    mean = jnp.mean(y, axis=-1, keepdims=True)
    var = jnp.mean((y - mean) ** 2, axis=-1, keepdims=True)
    return (y - mean) * lax.rsqrt(var + eps) * gamma + beta


if __name__ == "__main__":
    key = jax.random.PRNGKey(0)
    B, S = 2, 8
    in_dim, out_dim = 32, 32

    k_x, k_wf, k_bf, k_wg, k_bg = jax.random.split(key, 5)

    x = jax.random.normal(k_x, (B, S, in_dim), dtype=jnp.float32)

    # PyTorch-style Linear init, weights stored transposed as (in_dim, out_dim)
    bound = 1.0 / float(in_dim) ** 0.5
    wf = jax.random.uniform(k_wf, (in_dim, out_dim), jnp.float32, -bound, bound)
    bf = jax.random.uniform(k_bf, (out_dim,), jnp.float32, -bound, bound)
    wg = jax.random.uniform(k_wg, (in_dim, out_dim), jnp.float32, -bound, bound)
    bg = jax.random.uniform(k_bg, (out_dim,), jnp.float32, -bound, bound)
    # LayerNorm params (PyTorch default init)
    gamma = jnp.ones((out_dim,), jnp.float32)
    beta = jnp.zeros((out_dim,), jnp.float32)

    # Pack once (hoisted out of the per-call path).
    params = pack_filtered_linear_params(wf, bf, wg, bg, gamma, beta)

    out = filtered_linear(x, params)
    out = jax.block_until_ready(out)

    ref = _reference(x, wf, bf, wg, bg, gamma, beta)
    assert out.shape == (B, S, out_dim)
    assert jnp.allclose(out, ref, atol=2e-5, rtol=2e-5)

    print("KERNEL_OK")
</pallas_src>

<mosaic_0001>
module attributes {stable_mosaic.version = 11 : i64} {
  func.func @_fl_kernel_resident(%arg0: i32, %arg1: memref<8x32xf32, #tpu.memory_space<vmem>>, %arg2: memref<32x256xf32, #tpu.memory_space<vmem>>, %arg3: memref<1x256xf32, #tpu.memory_space<vmem>>, %arg4: memref<1x128xf32, #tpu.memory_space<vmem>>, %arg5: memref<1x128xf32, #tpu.memory_space<vmem>>, %arg6: memref<8x128xf32, #tpu.memory_space<vmem>>) attributes {dimension_semantics = [#tpu.dimension_semantics<parallel>], iteration_bounds = array<i64: 2>, scalar_prefetch = 0 : i64, scratch_operands = 0 : i64, tpu.core_type = #tpu.core_type<tc>, window_params = [{transform_indices = @transform_0, window_bounds = array<i64: 8, 32>}, {pipeline_mode = #tpu.pipeline_mode<synchronous>, transform_indices = @transform_1, window_bounds = array<i64: 32, 256>}, {pipeline_mode = #tpu.pipeline_mode<synchronous>, transform_indices = @transform_2, window_bounds = array<i64: 1, 256>}, {pipeline_mode = #tpu.pipeline_mode<synchronous>, transform_indices = @transform_3, window_bounds = array<i64: 1, 128>}, {pipeline_mode = #tpu.pipeline_mode<synchronous>, transform_indices = @transform_4, window_bounds = array<i64: 1, 128>}, {transform_indices = @transform_5, window_bounds = array<i64: 8, 128>}]} {
    %c0 = arith.constant 0 : index
    %c0_0 = arith.constant 0 : index
    %0 = vector.load %arg1[%c0, %c0_0] : memref<8x32xf32, #tpu.memory_space<vmem>>, vector<8x32xf32>
    %c0_1 = arith.constant 0 : index
    %c0_2 = arith.constant 0 : index
    %1 = vector.load %arg2[%c0_1, %c0_2] : memref<32x256xf32, #tpu.memory_space<vmem>>, vector<32x256xf32>
    %cst = arith.constant dense<0.000000e+00> : vector<8x256xf32>
    %2 = tpu.matmul %0, %1, %cst {dimension_numbers = #tpu.dot_dimension_numbers<[1], [0], [0], [1], [0, 0, 1, 1], [], []>} : vector<8x32xf32>, vector<32x256xf32>, vector<8x256xf32> -> vector<8x256xf32>
    %c0_3 = arith.constant 0 : index
    %c0_4 = arith.constant 0 : index
    %3 = vector.load %arg3[%c0_3, %c0_4] : memref<1x256xf32, #tpu.memory_space<vmem>>, vector<1x256xf32>
    %c0_5 = arith.constant 0 : index
    %c0_6 = arith.constant 0 : index
    %4 = vector.load %arg4[%c0_5, %c0_6] : memref<1x128xf32, #tpu.memory_space<vmem>>, vector<1x128xf32>
    %c0_7 = arith.constant 0 : index
    %c0_8 = arith.constant 0 : index
    %5 = vector.load %arg5[%c0_7, %c0_8] : memref<1x128xf32, #tpu.memory_space<vmem>>, vector<1x128xf32>
    %6 = vector.broadcast %3 : vector<1x256xf32> to vector<8x256xf32>
    %7 = arith.addf %2, %6 : vector<8x256xf32>
    %cst_9 = arith.constant 0.000000e+00 : f32
    %8 = vector.broadcast %cst_9 : f32 to vector<8x256xf32>
    %9 = arith.maximumf %7, %8 : vector<8x256xf32>
    %10 = vector.extract_strided_slice %9 {offsets = [0, 0], sizes = [8, 128], strides = [1, 1]} : vector<8x256xf32> to vector<8x128xf32>
    %11 = vector.extract_strided_slice %9 {offsets = [0, 128], sizes = [8, 128], strides = [1, 1]} : vector<8x256xf32> to vector<8x128xf32>
    %12 = arith.mulf %10, %11 : vector<8x128xf32>
    %cst_10 = arith.constant dense<0.000000e+00> : vector<8xf32>
    %13 = vector.multi_reduction <add>, %12, %cst_10 [1] : vector<8x128xf32> to vector<8xf32>
    %14 = vector.shape_cast %13 : vector<8xf32> to vector<8x1xf32>
    %cst_11 = arith.constant 3.125000e-02 : f32
    %15 = vector.broadcast %cst_11 : f32 to vector<8x1xf32>
    %16 = arith.mulf %14, %15 : vector<8x1xf32>
    %17 = tpu.iota {dimensions = array<i32: 1>} : vector<1x128xi32>
    %c32_i32 = arith.constant 32 : i32
    %18 = vector.broadcast %c32_i32 : i32 to vector<1x128xi32>
    %19 = arith.cmpi slt, %17, %18 : vector<1x128xi32>
    %20 = vector.broadcast %16 : vector<8x1xf32> to vector<8x128xf32>
    %21 = arith.subf %12, %20 : vector<8x128xf32>
    %cst_12 = arith.constant 0.000000e+00 : f32
    %22 = vector.shape_cast %19 : vector<1x128xi1> to vector<1x128xi1>
    %23 = vector.broadcast %22 : vector<1x128xi1> to vector<8x128xi1>
    %24 = vector.broadcast %cst_12 : f32 to vector<8x128xf32>
    %25 = arith.select %23, %21, %24 : vector<8x128xi1>, vector<8x128xf32>
    %26 = arith.mulf %25, %25 : vector<8x128xf32>
    %cst_13 = arith.constant dense<0.000000e+00> : vector<8xf32>
    %27 = vector.multi_reduction <add>, %26, %cst_13 [1] : vector<8x128xf32> to vector<8xf32>
    %28 = vector.shape_cast %27 : vector<8xf32> to vector<8x1xf32>
    %cst_14 = arith.constant 3.125000e-02 : f32
    %29 = vector.broadcast %cst_14 : f32 to vector<8x1xf32>
    %30 = arith.mulf %28, %29 : vector<8x1xf32>
    %cst_15 = arith.constant 9.99999974E-6 : f32
    %31 = vector.broadcast %cst_15 : f32 to vector<8x1xf32>
    %32 = arith.addf %30, %31 : vector<8x1xf32>
    %33 = math.rsqrt %32 : vector<8x1xf32>
    %34 = vector.broadcast %33 : vector<8x1xf32> to vector<8x128xf32>
    %35 = arith.mulf %25, %34 : vector<8x128xf32>
    %36 = vector.broadcast %4 : vector<1x128xf32> to vector<8x128xf32>
    %37 = arith.mulf %35, %36 : vector<8x128xf32>
    %38 = vector.broadcast %5 : vector<1x128xf32> to vector<8x128xf32>
    %39 = arith.addf %37, %38 : vector<8x128xf32>
    %c0_16 = arith.constant 0 : index
    %c0_17 = arith.constant 0 : index
    %40 = vector.load %arg6[%c0_16, %c0_17] : memref<8x128xf32, #tpu.memory_space<vmem>>, vector<8x128xf32>
    tpu.vector_store %arg6[%c0_16, %c0_17], %39 {strides = array<i32>} : memref<8x128xf32, #tpu.memory_space<vmem>>, vector<8x128xf32>,
    return
  }
  func.func @transform_0(%arg0: i32) -> (i32, i32) {
    %c0_i32 = arith.constant 0 : i32
    %c0_i32_0 = arith.constant 0 : i32
    return %arg0, %c0_i32 : i32, i32
  }
  func.func @transform_1(%arg0: i32) -> (i32, i32) {
    %c0_i32 = arith.constant 0 : i32
    %c0_i32_0 = arith.constant 0 : i32
    %c0_i32_1 = arith.constant 0 : i32
    return %c0_i32, %c0_i32_0 : i32, i32
  }
  func.func @transform_2(%arg0: i32) -> (i32, i32) {
    %c0_i32 = arith.constant 0 : i32
    %c0_i32_0 = arith.constant 0 : i32
    %c0_i32_1 = arith.constant 0 : i32
    return %c0_i32, %c0_i32_0 : i32, i32
  }
  func.func @transform_3(%arg0: i32) -> (i32, i32) {
    %c0_i32 = arith.constant 0 : i32
    %c0_i32_0 = arith.constant 0 : i32
    %c0_i32_1 = arith.constant 0 : i32
    return %c0_i32, %c0_i32_0 : i32, i32
  }
  func.func @transform_4(%arg0: i32) -> (i32, i32) {
    %c0_i32 = arith.constant 0 : i32
    %c0_i32_0 = arith.constant 0 : i32
    %c0_i32_1 = arith.constant 0 : i32
    return %c0_i32, %c0_i32_0 : i32, i32
  }
  func.func @transform_5(%arg0: i32) -> (i32, i32) {
    %c0_i32 = arith.constant 0 : i32
    %c0_i32_0 = arith.constant 0 : i32
    return %arg0, %c0_i32 : i32, i32
  }
}

module attributes {stable_mosaic.version = 11 : i64} {
  func.func @_fl_kernel_resident(%arg0: i32, %arg1: memref<8x32xf32, #tpu.memory_space<vmem>>, %arg2: memref<32x256xf32, #tpu.memory_space<vmem>>, %arg3: memref<1x256xf32, #tpu.memory_space<vmem>>, %arg4: memref<1x128xf32, #tpu.memory_space<vmem>>, %arg5: memref<1x128xf32, #tpu.memory_space<vmem>>, %arg6: memref<8x128xf32, #tpu.memory_space<vmem>>) attributes {dimension_semantics = [#tpu.dimension_semantics<parallel>], iteration_bounds = array<i64: 2>, scalar_prefetch = 0 : i64, scratch_operands = 0 : i64, tpu.core_type = #tpu.core_type<tc>, window_params = [{transform_indices = @transform_0, window_bounds = array<i64: 8, 32>}, {pipeline_mode = #tpu.pipeline_mode<synchronous>, transform_indices = @transform_1, window_bounds = array<i64: 32, 256>}, {pipeline_mode = #tpu.pipeline_mode<synchronous>, transform_indices = @transform_2, window_bounds = array<i64: 1, 256>}, {pipeline_mode = #tpu.pipeline_mode<synchronous>, transform_indices = @transform_3, window_bounds = array<i64: 1, 128>}, {pipeline_mode = #tpu.pipeline_mode<synchronous>, transform_indices = @transform_4, window_bounds = array<i64: 1, 128>}, {transform_indices = @transform_5, window_bounds = array<i64: 8, 128>}]} {
    %c0 = arith.constant 0 : index
    %c0_0 = arith.constant 0 : index
    %0 = vector.load %arg1[%c0, %c0_0] : memref<8x32xf32, #tpu.memory_space<vmem>>, vector<8x32xf32>
    %c0_1 = arith.constant 0 : index
    %c0_2 = arith.constant 0 : index
    %1 = vector.load %arg2[%c0_1, %c0_2] : memref<32x256xf32, #tpu.memory_space<vmem>>, vector<32x256xf32>
    %cst = arith.constant dense<0.000000e+00> : vector<8x256xf32>
    %2 = tpu.matmul %0, %1, %cst {dimension_numbers = #tpu.dot_dimension_numbers<[1], [0], [0], [1], [0, 0, 1, 1], [], []>} : vector<8x32xf32>, vector<32x256xf32>, vector<8x256xf32> -> vector<8x256xf32>
    %c0_3 = arith.constant 0 : index
    %c0_4 = arith.constant 0 : index
    %3 = vector.load %arg3[%c0_3, %c0_4] : memref<1x256xf32, #tpu.memory_space<vmem>>, vector<1x256xf32>
    %c0_5 = arith.constant 0 : index
    %c0_6 = arith.constant 0 : index
    %4 = vector.load %arg4[%c0_5, %c0_6] : memref<1x128xf32, #tpu.memory_space<vmem>>, vector<1x128xf32>
    %c0_7 = arith.constant 0 : index
    %c0_8 = arith.constant 0 : index
    %5 = vector.load %arg5[%c0_7, %c0_8] : memref<1x128xf32, #tpu.memory_space<vmem>>, vector<1x128xf32>
    %6 = vector.broadcast %3 : vector<1x256xf32> to vector<8x256xf32>
    %7 = arith.addf %2, %6 : vector<8x256xf32>
    %cst_9 = arith.constant 0.000000e+00 : f32
    %8 = vector.broadcast %cst_9 : f32 to vector<8x256xf32>
    %9 = arith.maximumf %7, %8 : vector<8x256xf32>
    %10 = vector.extract_strided_slice %9 {offsets = [0, 0], sizes = [8, 128], strides = [1, 1]} : vector<8x256xf32> to vector<8x128xf32>
    %11 = vector.extract_strided_slice %9 {offsets = [0, 128], sizes = [8, 128], strides = [1, 1]} : vector<8x256xf32> to vector<8x128xf32>
    %12 = arith.mulf %10, %11 : vector<8x128xf32>
    %cst_10 = arith.constant dense<0.000000e+00> : vector<8xf32>
    %13 = vector.multi_reduction <add>, %12, %cst_10 [1] : vector<8x128xf32> to vector<8xf32>
    %14 = vector.shape_cast %13 : vector<8xf32> to vector<8x1xf32>
    %cst_11 = arith.constant 3.125000e-02 : f32
    %15 = vector.broadcast %cst_11 : f32 to vector<8x1xf32>
    %16 = arith.mulf %14, %15 : vector<8x1xf32>
    %17 = tpu.iota {dimensions = array<i32: 1>} : vector<1x128xi32>
    %c32_i32 = arith.constant 32 : i32
    %18 = vector.broadcast %c32_i32 : i32 to vector<1x128xi32>
    %19 = arith.cmpi slt, %17, %18 : vector<1x128xi32>
    %20 = vector.broadcast %16 : vector<8x1xf32> to vector<8x128xf32>
    %21 = arith.subf %12, %20 : vector<8x128xf32>
    %cst_12 = arith.constant 0.000000e+00 : f32
    %22 = vector.shape_cast %19 : vector<1x128xi1> to vector<1x128xi1>
    %23 = vector.broadcast %22 : vector<1x128xi1> to vector<8x128xi1>
    %24 = vector.broadcast %cst_12 : f32 to vector<8x128xf32>
    %25 = arith.select %23, %21, %24 : vector<8x128xi1>, vector<8x128xf32>
    %26 = arith.mulf %25, %25 : vector<8x128xf32>
    %cst_13 = arith.constant dense<0.000000e+00> : vector<8xf32>
    %27 = vector.multi_reduction <add>, %26, %cst_13 [1] : vector<8x128xf32> to vector<8xf32>
    %28 = vector.shape_cast %27 : vector<8xf32> to vector<8x1xf32>
    %cst_14 = arith.constant 3.125000e-02 : f32
    %29 = vector.broadcast %cst_14 : f32 to vector<8x1xf32>
    %30 = arith.mulf %28, %29 : vector<8x1xf32>
    %cst_15 = arith.constant 9.99999974E-6 : f32
    %31 = vector.broadcast %cst_15 : f32 to vector<8x1xf32>
    %32 = arith.addf %30, %31 : vector<8x1xf32>
    %33 = math.rsqrt %32 : vector<8x1xf32>
    %34 = vector.broadcast %33 : vector<8x1xf32> to vector<8x128xf32>
    %35 = arith.mulf %25, %34 : vector<8x128xf32>
    %36 = vector.broadcast %4 : vector<1x128xf32> to vector<8x128xf32>
    %37 = arith.mulf %35, %36 : vector<8x128xf32>
    %38 = vector.broadcast %5 : vector<1x128xf32> to vector<8x128xf32>
    %39 = arith.addf %37, %38 : vector<8x128xf32>
    %c0_16 = arith.constant 0 : index
    %c0_17 = arith.constant 0 : index
    %40 = vector.load %arg6[%c0_16, %c0_17] : memref<8x128xf32, #tpu.memory_space<vmem>>, vector<8x128xf32>
    tpu.vector_store %arg6[%c0_16, %c0_17], %39 {strides = array<i32>} : memref<8x128xf32, #tpu.memory_space<vmem>>, vector<8x128xf32>,
    return
  }
  func.func @transform_0(%arg0: i32) -> (i32, i32) {
    %c0_i32 = arith.constant 0 : i32
    %c0_i32_0 = arith.constant 0 : i32
    return %arg0, %c0_i32 : i32, i32
  }
  func.func @transform_1(%arg0: i32) -> (i32, i32) {
    %c0_i32 = arith.constant 0 : i32
    %c0_i32_0 = arith.constant 0 : i32
    %c0_i32_1 = arith.constant 0 : i32
    return %c0_i32, %c0_i32_0 : i32, i32
  }
  func.func @transform_2(%arg0: i32) -> (i32, i32) {
    %c0_i32 = arith.constant 0 : i32
    %c0_i32_0 = arith.constant 0 : i32
    %c0_i32_1 = arith.constant 0 : i32
    return %c0_i32, %c0_i32_0 : i32, i32
  }
  func.func @transform_3(%arg0: i32) -> (i32, i32) {
    %c0_i32 = arith.constant 0 : i32
    %c0_i32_0 = arith.constant 0 : i32
    %c0_i32_1 = arith.constant 0 : i32
    return %c0_i32, %c0_i32_0 : i32, i32
  }
  func.func @transform_4(%arg0: i32) -> (i32, i32) {
    %c0_i32 = arith.constant 0 : i32
    %c0_i32_0 = arith.constant 0 : i32
    %c0_i32_1 = arith.constant 0 : i32
    return %c0_i32, %c0_i32_0 : i32, i32
  }
  func.func @transform_5(%arg0: i32) -> (i32, i32) {
    %c0_i32 = arith.constant 0 : i32
    %c0_i32_0 = arith.constant 0 : i32
    return %arg0, %c0_i32 : i32, i32
  }
}

</mosaic_0001>

<llo_original>
// kernel: tpu_custom_call.1
$region0: #{tpu_custom_call.1}
  #allocation0 [shape = 'u32[]', space=smem, size = 0x4, offset = 0x4, fixed_abs, tag = 'smem constant byte address 0x4 - core index']
  #allocation1 [shape = 'u32[144,128]{1,0:T(1,128)}', space=vmem, size = 0x12000, scoped, tag = 'internal scratch']
  %s0 = inlined_call_operand.hbm [shape: f32[16,32], index: 0, kind: input, shape index: {}]
  %s1 = inlined_call_operand.hbm [shape: f32[32,256], index: 1, kind: input, shape index: {}]
  %s2 = inlined_call_operand.vmem [shape: f32[1,256], index: 2, kind: input, shape index: {}]
  %s3 = inlined_call_operand.vmem [shape: f32[1,128], index: 3, kind: input, shape index: {}]
  %s4 = inlined_call_operand.vmem [shape: f32[1,128], index: 4, kind: input, shape index: {}]
  %s5 = inlined_call_operand.hbm [shape: f32[16,128], index: 5, kind: output, shape index: {}]
  %s6 = sld [smem:[#allocation0]]
  $region61: #{tpu_custom_call.1} parent=0
    _
  %s8 = ssub.s32 1, %s6
  %s9 = scalar_select 0, %s8, %s6
  $region1: #{tpu_custom_call.1} parent=0
    #allocation2 [shape = 'u8[8192]{0}', space=vmem, size = 0x2000, scoped, tag = 'input window, operand 0']
    #allocation3 [shape = 's32[2]{0}', space=sflag, size = 0x8, scoped, tag = 'scoped memory for tpu_custom_call.1']
    #allocation4 [shape = 's32[2]{0}', space=sflag, size = 0x8, scoped, tag = 'scoped memory for tpu_custom_call.1']
    #allocation5 [shape = 'u8[32768]{0}', space=vmem, size = 0x8000, scoped, tag = 'input window, operand 1, single buffered']
    #allocation6 [shape = 's32[1]{0}', space=sflag, size = 0x4, scoped, tag = 'scoped memory for tpu_custom_call.1']
    #allocation7 [shape = 'u8[8192]{0}', space=vmem, size = 0x2000, scoped, tag = 'output window, operand 0']
    %10 = vsyncpa [#allocation3], 0
    %s11 = scalar_lea.sflag [#allocation3], 1
    %12 = vsyncpa %s11, 0
    %13 = vsyncpa [#allocation6], 0
    %14 = vsyncpa [#allocation4], 0
    %s15 = scalar_lea.sflag [#allocation4], 1
    %16 = vsyncpa %s15, 0
    loop: start=0, step=1, limit=4
    $region2: #{tpu_custom_call.1} parent=1 // loop_pre_header
      _
    $region3: #{tpu_custom_call.1} parent=1 // loop_header
      %s18 = sphi 0, %s22
      %p19 = scmp.ge.s32.totalorder %s18, 4
      %s28 = sphi 0, %s30
      %s31 = sphi 0, %s28
      %s32 = sphi 0, %s31
      %s48 = sphi 0, %s32
      %s52 = sphi 0, %s52
      %s54 = sphi 0, %s52
      %s55 = sphi 0, %s54
      %s69 = sphi 0, %s55
      %s73 = sphi 0, %s73
      %s75 = sphi 0, %s73
      %s76 = sphi 0, %s75
      %s90 = sphi 0, %s76
      %s94 = sphi 0, %s94
      %s96 = sphi 0, %s94
      %s97 = sphi 0, %s96
      %s111 = sphi 0, %s97
      %s115 = sphi 0, %s115
      %s117 = sphi 0, %s115
      %s118 = sphi 0, %s117
      %s132 = sphi 0, %s118
      %s138 = sphi 0, %s140
      %s141 = sphi 0, %s138
      %s142 = sphi 0, %s141
      %s158 = sphi 0, %s142
    $region4: #{tpu_custom_call.1} parent=1 // loop_header_branch
      %21 = sbr.rel (%p19) target = $region8
    $region5: #{tpu_custom_call.1} parent=1 // loop_body
      %s23 = ssub.s32 %s18, 1
      %s24 = ssub.s32 %s18, 2
      %s25 = sadd.s32 %s18, 1
      %s26 = ssub.s32 %s18, %s25
      %p27 = scmp.eq.s32.totalorder %s26, 0
      %s29 = sadd.s32 %s28, 1
      %s30 = scalar_select %p27, %s28, %s29
      %p33 = pneg %p27
      %p34 = scmp.eq.s32.totalorder %s18, 1
      %p35 = por %p33, %p34
      %p36 = scmp.ne.s32.totalorder %s28, %s31
      %p37 = scmp.eq.s32.totalorder %s18, 0
      %p38 = por %p36, %p37
      %p39 = scmp.ne.s32.totalorder %s28, %s31
      %p40 = scmp.eq.s32.totalorder %s23, 1
      %p41 = por %p39, %p40
      %p42 = scmp.ne.s32.totalorder %s31, %s32
      %p43 = scmp.eq.s32.totalorder %s23, 0
      %p44 = por %p42, %p43
      %p45 = scmp.ne.s32.totalorder %s31, %s32
      %p46 = scmp.eq.s32.totalorder %s24, 1
      %p47 = por %p45, %p46
      %p49 = scmp.ne.s32.totalorder %s32, %s48
      %p50 = scmp.eq.s32.totalorder %s24, 0
      %p51 = por %p49, %p50
      %s53 = sadd.s32 %s52, 1
      %p56 = scmp.eq.s32.totalorder %s18, 1
      %p57 = scmp.ne.s32.totalorder %s52, %s54
      %p58 = scmp.eq.s32.totalorder %s18, 0
      %p59 = por %p57, %p58
      %p60 = scmp.ne.s32.totalorder %s52, %s54
      %p61 = scmp.eq.s32.totalorder %s23, 1
      %p62 = por %p60, %p61
      %p63 = scmp.ne.s32.totalorder %s54, %s55
      %p64 = scmp.eq.s32.totalorder %s23, 0
      %p65 = por %p63, %p64
      %p66 = scmp.ne.s32.totalorder %s54, %s55
      %p67 = scmp.eq.s32.totalorder %s24, 1
      %p68 = por %p66, %p67
      %p70 = scmp.ne.s32.totalorder %s55, %s69
      %p71 = scmp.eq.s32.totalorder %s24, 0
      %p72 = por %p70, %p71
      %s74 = sadd.s32 %s73, 1
      %p77 = scmp.eq.s32.totalorder %s18, 1
      %p78 = scmp.ne.s32.totalorder %s73, %s75
      %p79 = scmp.eq.s32.totalorder %s18, 0
      %p80 = por %p78, %p79
      %p81 = scmp.ne.s32.totalorder %s73, %s75
      %p82 = scmp.eq.s32.totalorder %s23, 1
      %p83 = por %p81, %p82
      %p84 = scmp.ne.s32.totalorder %s75, %s76
      %p85 = scmp.eq.s32.totalorder %s23, 0
      %p86 = por %p84, %p85
      %p87 = scmp.ne.s32.totalorder %s75, %s76
      %p88 = scmp.eq.s32.totalorder %s24, 1
      %p89 = por %p87, %p88
      %p91 = scmp.ne.s32.totalorder %s76, %s90
      %p92 = scmp.eq.s32.totalorder %s24, 0
      %p93 = por %p91, %p92
      %s95 = sadd.s32 %s94, 1
      %p98 = scmp.eq.s32.totalorder %s18, 1
      %p99 = scmp.ne.s32.totalorder %s94, %s96
      %p100 = scmp.eq.s32.totalorder %s18, 0
      %p101 = por %p99, %p100
      %p102 = scmp.ne.s32.totalorder %s94, %s96
      %p103 = scmp.eq.s32.totalorder %s23, 1
      %p104 = por %p102, %p103
      %p105 = scmp.ne.s32.totalorder %s96, %s97
      %p106 = scmp.eq.s32.totalorder %s23, 0
      %p107 = por %p105, %p106
      %p108 = scmp.ne.s32.totalorder %s96, %s97
      %p109 = scmp.eq.s32.totalorder %s24, 1
      %p110 = por %p108, %p109
      %p112 = scmp.ne.s32.totalorder %s97, %s111
      %p113 = scmp.eq.s32.totalorder %s24, 0
      %p114 = por %p112, %p113
      %s116 = sadd.s32 %s115, 1
      %p119 = scmp.eq.s32.totalorder %s18, 1
      %p120 = scmp.ne.s32.totalorder %s115, %s117
      %p121 = scmp.eq.s32.totalorder %s18, 0
      %p122 = por %p120, %p121
      %p123 = scmp.ne.s32.totalorder %s115, %s117
      %p124 = scmp.eq.s32.totalorder %s23, 1
      %p125 = por %p123, %p124
      %p126 = scmp.ne.s32.totalorder %s117, %s118
      %p127 = scmp.eq.s32.totalorder %s23, 0
      %p128 = por %p126, %p127
      %p129 = scmp.ne.s32.totalorder %s117, %s118
      %p130 = scmp.eq.s32.totalorder %s24, 1
      %p131 = por %p129, %p130
      %p133 = scmp.ne.s32.totalorder %s118, %s132
      %p134 = scmp.eq.s32.totalorder %s24, 0
      %p135 = por %p133, %p134
      %s136 = ssub.s32 %s18, %s25
      %p137 = scmp.eq.s32.totalorder %s136, 0
      %s139 = sadd.s32 %s138, 1
      %s140 = scalar_select %p137, %s138, %s139
      %p143 = pneg %p137
      %p144 = scmp.eq.s32.totalorder %s18, 1
      %p145 = por %p143, %p144
      %p146 = scmp.ne.s32.totalorder %s138, %s141
      %p147 = scmp.eq.s32.totalorder %s18, 0
      %p148 = por %p146, %p147
      %p149 = scmp.ne.s32.totalorder %s138, %s141
      %p150 = scmp.eq.s32.totalorder %s23, 1
      %p151 = por %p149, %p150
      %p152 = scmp.ne.s32.totalorder %s141, %s142
      %p153 = scmp.eq.s32.totalorder %s23, 0
      %p154 = por %p152, %p153
      %p155 = scmp.ne.s32.totalorder %s141, %s142
      %p156 = scmp.eq.s32.totalorder %s24, 1
      %p157 = por %p155, %p156
      %p159 = scmp.ne.s32.totalorder %s142, %s158
      %p160 = scmp.eq.s32.totalorder %s24, 0
      %p161 = por %p159, %p160
      %p162 = scmp.le.s32.totalorder 1, %s18
      %p163 = scmp.lt.s32.totalorder %s18, 3
      %p164 = pnand %p162, %p163
      %p165 = pneg %p164
      // Predicated region
      $region9: #{tpu_custom_call.1} parent=5 // pred_check
        _
      $region10: #{tpu_custom_call.1} parent=5 // pred_check_branch
        %167 = sbr.rel (%p164) target = $region12
      $region11: #{tpu_custom_call.1} parent=5 // pred_region
        %s168 = ssub.s32 %s18, 1
        // Predicated region
        $region13: #{tpu_custom_call.1} parent=11 // pred_check
          %p169 = pneg %p65
        $region14: #{tpu_custom_call.1} parent=11 // pred_check_branch
          %171 = sbr.rel (%p169) target = $region16
        $region15: #{tpu_custom_call.1} parent=11 // pred_region
          %s173 = ssub.s32 1024, 1024
          %174 = vsyncadd [#allocation6], %s173
          %s175 = sshll.u32 [#allocation5], 4
          %s176 = int_to_ptr.vmem [resolvable:$true] %s175
          %181 = dma.hbm_to_vmem [thread:$0]  %s1, 1024, %s176, [#allocation6], 256, 256, 16
        $region16: #{tpu_custom_call.1} parent=11 // pred_fallthru
          _
        // Predicated region
        $region17: #{tpu_custom_call.1} parent=11 // pred_check
          %p182 = pneg %p86
        $region18: #{tpu_custom_call.1} parent=11 // pred_check_branch
          %184 = sbr.rel (%p182) target = $region20
        $region19: #{tpu_custom_call.1} parent=11 // pred_region
          _
        $region20: #{tpu_custom_call.1} parent=11 // pred_fallthru
          _
        // Predicated region
        $region21: #{tpu_custom_call.1} parent=11 // pred_check
          %p185 = pneg %p107
        $region22: #{tpu_custom_call.1} parent=11 // pred_check_branch
          %187 = sbr.rel (%p185) target = $region24
        $region23: #{tpu_custom_call.1} parent=11 // pred_region
          _
        $region24: #{tpu_custom_call.1} parent=11 // pred_fallthru
          _
        // Predicated region
        $region25: #{tpu_custom_call.1} parent=11 // pred_check
          %p188 = pneg %p128
        $region26: #{tpu_custom_call.1} parent=11 // pred_check_branch
          %190 = sbr.rel (%p188) target = $region28
        $region27: #{tpu_custom_call.1} parent=11 // pred_region
          _
        $region28: #{tpu_custom_call.1} parent=11 // pred_fallthru
          _
      $region12: #{tpu_custom_call.1} parent=5 // pred_fallthru
        _
      %p191 = scmp.lt.s32.totalorder %s18, 2
      // Predicated region
      $region29: #{tpu_custom_call.1} parent=5 // pred_check
        %p192 = pneg %p191
      $region30: #{tpu_custom_call.1} parent=5 // pred_check_branch
        %194 = sbr.rel (%p192) target = $region32
      $region31: #{tpu_custom_call.1} parent=5 // pred_region
        // Predicated region
        $region33: #{tpu_custom_call.1} parent=31 // pred_check
          %p195 = pneg %p38
        $region34: #{tpu_custom_call.1} parent=31 // pred_check_branch
          %197 = sbr.rel (%p195) target = $region36
        $region35: #{tpu_custom_call.1} parent=31 // pred_region
          %s198 = sand.u32 %s28, 1
          %s199 = scalar_lea.sflag [#allocation3], %s198
          %s200 = sand.u32 %s28, 1
          %s201 = smul.addr %s200, 8
          %s202 = scalar_lea.vmem [#allocation2], %s201
          %s204 = ssub.s32 128, 128
          %205 = vsyncadd %s199, %s204
          %s206 = smul.addr %s18, 128
          %s207 = scalar_lea.hbm %s0, %s206
          %s209 = sshll.u32 %s202, 4
          %s210 = int_to_ptr.vmem [resolvable:$true] %s209
          %212 = dma.hbm_to_vmem [thread:$0]  %s207, 128, %s210, %s199
        $region36: #{tpu_custom_call.1} parent=31 // pred_fallthru
          _
      $region32: #{tpu_custom_call.1} parent=5 // pred_fallthru
        _
      %p213 = scmp.le.s32.totalorder 1, %s18
      %p214 = scmp.lt.s32.totalorder %s18, 3
      %p215 = pnand %p213, %p214
      %p216 = pneg %p215
      // Predicated region
      $region37: #{tpu_custom_call.1} parent=5 // pred_check
        _
      $region38: #{tpu_custom_call.1} parent=5 // pred_check_branch
        %218 = sbr.rel (%p215) target = $region40
      $region39: #{tpu_custom_call.1} parent=5 // pred_region
        %s219 = ssub.s32 %s18, 1
        %s220 = sand.u32 %s31, 1
        %s221 = scalar_lea.sflag [#allocation3], %s220
        %s222 = sand.u32 %s31, 1
        %s223 = smul.addr %s222, 8
        %s224 = scalar_lea.vmem [#allocation2], %s223
        // Predicated region
        $region41: #{tpu_custom_call.1} parent=39 // pred_check
          %p225 = pneg %p44
        $region42: #{tpu_custom_call.1} parent=39 // pred_check_branch
          %227 = sbr.rel (%p225) target = $region44
        $region43: #{tpu_custom_call.1} parent=39 // pred_region
          %228 = dma.done %s221, 128
        $region44: #{tpu_custom_call.1} parent=39 // pred_fallthru
          _
        // Predicated region
        $region45: #{tpu_custom_call.1} parent=39 // pred_check
          %p229 = pneg %p65
        $region46: #{tpu_custom_call.1} parent=39 // pred_check_branch
          %231 = sbr.rel (%p229) target = $region48
        $region47: #{tpu_custom_call.1} parent=39 // pred_region
          %232 = dma.done [#allocation6], 1024
        $region48: #{tpu_custom_call.1} parent=39 // pred_fallthru
          _
        %s233 = sand.u32 %s31, 1
        %s234 = scalar_lea.sflag [#allocation3], %s233
        %s235 = sand.u32 %s31, 1
        %s236 = smul.addr %s235, 8
        %s237 = scalar_lea.vmem [#allocation2], %s236
        %p238 = pneg %p44
        %p239 = pneg %p41
        %p240 = pneg %p65
        %p241 = pneg %p62
        %p242 = pneg %p86
        %p243 = pneg %p83
        %p244 = pneg %p107
        %p245 = pneg %p104
        %p246 = pneg %p128
        %p247 = pneg %p125
        %p248 = pneg %p154
        %p249 = pneg %p151
        %s250 = sand.u32 %s141, 1
        %s251 = scalar_lea.sflag [#allocation4], %s250
        %s252 = sand.u32 %s141, 1
        %s253 = smul.addr %s252, 8
        %s254 = scalar_lea.vmem [#allocation7], %s253
        %v255 = vld [vmem:[%s224] sm:$0xff]
        %v256 = vld [vmem:[#allocation5] sm:$0xff]
        %v257 = vld [vmem:[#allocation5 + $0x8] sm:$0xff]
        %v258 = vld [vmem:[#allocation5 + $0x10] sm:$0xff]
        %v259 = vld [vmem:[#allocation5 + $0x18] sm:$0xff]
        %v260 = vld [vmem:[#allocation5 + $0x20] sm:$0xff]
        %v261 = vld [vmem:[#allocation5 + $0x28] sm:$0xff]
        %v262 = vld [vmem:[#allocation5 + $0x30] sm:$0xff]
        %v263 = vld [vmem:[#allocation5 + $0x38] sm:$0xff]
        %v264 = vld [vmem:[%s2] sm:$0x3]
        %v265 = vld [vmem:[%s3] sm:$0x1]
        %v266 = vld [vmem:[%s4] sm:$0x1]
        %v268 = vlaneseq
        %v269 = vshrl.u32 %v268, 7
        %v270 = vsub.s32 0, %v269
        %v271 = vrot.slane %v264, %v270
        %v272 = vlaneseq
        %v273 = vshrl.u32 %v272, 7
        %v274 = vsub.s32 1, %v273
        %v275 = vrot.slane %v264, %v274
        %vm278 = vcmask 261120
        %v280 = vsel %vm278, %v255, 0
        %282 = vmatprep.subr.mxu0 0.0
        %283 = vmatpush1.msra.mxu0 0.0
        %284 = vmatprep.subr.mxu0 0.0
        %285 = vmatpush1.msra.mxu0 0.0
        %286 = vmatprep.subr.mxu0 0.0
        %287 = vmatpush1.msra.mxu0 0.0
        %288 = vmatprep.subr.mxu0 0.0
        %289 = vmatpush1.msra.mxu0 0.0
        %290 = vmatprep.subr.mxu0 0.0
        %291 = vmatpush1.msra.mxu0 0.0
        %292 = vmatprep.subr.mxu0 0.0
        %293 = vmatpush1.msra.mxu0 0.0
        %294 = vmatprep.subr.mxu0 0.0
        %295 = vmatpush1.msra.mxu0 0.0
        %296 = vmatprep.subr.mxu0 0.0
        %297 = vmatpush1.msra.mxu0 0.0
        %298 = vmatprep.subr.mxu0 0.0
        %299 = vmatpush1.msra.mxu0 0.0
        %300 = vmatprep.subr.mxu0 0.0
        %301 = vmatpush1.msra.mxu0 0.0
        %302 = vmatprep.subr.mxu0 0.0
        %303 = vmatpush1.msra.mxu0 0.0
        %304 = vmatprep.subr.mxu0 0.0
        %305 = vmatpush1.msra.mxu0 0.0
        %306 = vmatprep.subr.mxu0 %v263
        %307 = vmatpush1.msra.mxu0 %v262
        %308 = vmatprep.subr.mxu0 %v261
        %309 = vmatpush1.msra.mxu0 %v260
        %310 = vmatprep.subr.mxu0 %v259
        %311 = vmatpush1.msra.mxu0 %v258
        %312 = vmatprep.subr.mxu0 %v257
        %313 = vmatpush1.msra.mxu0 %v256
        %314 = vmatprep.subr.mxu0 0.0
        %315 = vmatpush2.msra.mxu0 0.0
        %316 = vmatprep.subr.mxu0 0.0
        %317 = vmatpush2.msra.mxu0 0.0
        %318 = vmatprep.subr.mxu0 0.0
        %319 = vmatpush2.msra.mxu0 0.0
        %320 = vmatprep.subr.mxu0 0.0
        %321 = vmatpush2.msra.mxu0 0.0
        %322 = vmatprep.subr.mxu0 0.0
        %323 = vmatpush2.msra.mxu0 0.0
        %324 = vmatprep.subr.mxu0 0.0
        %325 = vmatpush2.msra.mxu0 0.0
        %326 = vmatprep.subr.mxu0 0.0
        %327 = vmatpush2.msra.mxu0 0.0
        %328 = vmatprep.subr.mxu0 0.0
        %329 = vmatpush2.msra.mxu0 0.0
        %330 = vmatprep.subr.mxu0 0.0
        %331 = vmatpush2.msra.mxu0 0.0
        %332 = vmatprep.subr.mxu0 0.0
        %333 = vmatpush2.msra.mxu0 0.0
        %334 = vmatprep.subr.mxu0 0.0
        %335 = vmatpush2.msra.mxu0 0.0
        %336 = vmatprep.subr.mxu0 0.0
        %337 = vmatpush2.msra.mxu0 0.0
        %338 = vmatprep.subr.mxu0 0.0
        %339 = vmatpush2.msra.mxu0 0.0
        %340 = vmatprep.subr.mxu0 0.0
        %341 = vmatpush2.msra.mxu0 0.0
        %342 = vmatprep.subr.mxu0 0.0
        %343 = vmatpush2.msra.mxu0 0.0
        %344 = vmatprep.subr.mxu0 0.0
        %345 = vmatpush2.msra.mxu0 0.0
        %346 = vmatprep.mubr.f32.mxu0 0.0
        %347 = vmatmul.mubr.f32.gmra.mxu0 %v280
        %v348 = vpop.f32.mrf.mxu0
        %v349 = vadd.f32 %v271, %v348
        %v350 = vpop.f32.mrf.mxu0
        %v351 = vadd.f32 %v275, %v350
        %352 = vdwg.mxu0
        %v353 = vmax.f32 %v349, 0.0
        %v354 = vmax.f32 %v351, 0.0
        %v355 = vmul.f32 %v353, %v354
        %356 = vadd.xlane.f32.xlu0 %v355
        %v357 = vpop.xlane.xlu0 %356
        %v358 = vmul.f32 %v357, 0.03125
        %v359 = vlaneseq
        %v360 = vand.u32 %v359, 127
        %vm361 = vcmp.lt.s32.totalorder %v360, 32
        %v362 = vsub.f32 %v355, %v358
        %v363 = vsel %vm361, 1, 0
        %vm364 = vcmp.eq.s32.totalorder %v363, 1
        %v365 = vsel %vm364, %v362, 0.0
        %v366 = vmul.f32 %v365, %v365
        %367 = vadd.xlane.f32.xlu0 %v366
        %v368 = vpop.xlane.xlu0 %367
        %v369 = vmul.f32 %v368, 0.03125
        %v370 = vadd.f32 %v369, 1e-05
        %v371 = vrsqrt.pop %v370
        %v372 = vmul.f32 %v365, %v371
        %v374 = vlaneseq
        %v375 = vshrl.u32 %v374, 7
        %v376 = vsub.s32 0, %v375
        %v377 = vrot.slane %v265, %v376
        %v379 = vmul.f32 %v372, %v377
        %v381 = vlaneseq
        %v382 = vshrl.u32 %v381, 7
        %v383 = vsub.s32 0, %v382
        %v384 = vrot.slane %v266, %v383
        %v386 = vadd.f32 %v379, %v384
        %387 = vst [vmem:[%s254] sm:$0xff] %v386
        %s388 = sand.u32 %s141, 1
        %s389 = scalar_lea.sflag [#allocation4], %s388
        %s390 = sand.u32 %s141, 1
        %s391 = smul.addr %s390, 8
        %s392 = scalar_lea.vmem [#allocation7], %s391
        // Predicated region
        $region49: #{tpu_custom_call.1} parent=39 // pred_check
          %p393 = pneg %p151
        $region50: #{tpu_custom_call.1} parent=39 // pred_check_branch
          %395 = sbr.rel (%p393) target = $region52
        $region51: #{tpu_custom_call.1} parent=39 // pred_region
          %s397 = ssub.s32 128, 128
          %398 = vsyncadd %s389, %s397
          %s399 = smul.addr %s23, 128
          %s400 = scalar_lea.hbm %s5, %s399
          %s402 = sshll.u32 %s392, 4
          %s403 = int_to_ptr.vmem [resolvable:$true] %s402
          %405 = dma.vmem_to_hbm [thread:$0]  %s403, 128, %s400, %s389
        $region52: #{tpu_custom_call.1} parent=39 // pred_fallthru
          _
      $region40: #{tpu_custom_call.1} parent=5 // pred_fallthru
        _
      %p406 = scmp.le.s32.totalorder 2, %s18
      // Predicated region
      $region53: #{tpu_custom_call.1} parent=5 // pred_check
        %p407 = pneg %p406
      $region54: #{tpu_custom_call.1} parent=5 // pred_check_branch
        %409 = sbr.rel (%p407) target = $region56
      $region55: #{tpu_custom_call.1} parent=5 // pred_region
        %s410 = ssub.s32 %s18, 2
        // Predicated region
        $region57: #{tpu_custom_call.1} parent=55 // pred_check
          %p411 = pneg %p157
        $region58: #{tpu_custom_call.1} parent=55 // pred_check_branch
          %413 = sbr.rel (%p411) target = $region60
        $region59: #{tpu_custom_call.1} parent=55 // pred_region
          %s414 = sand.u32 %s142, 1
          %s415 = scalar_lea.sflag [#allocation4], %s414
          %s416 = sand.u32 %s142, 1
          %s417 = smul.addr %s416, 8
          %s418 = scalar_lea.vmem [#allocation7], %s417
          %419 = dma.done %s415, 128
        $region60: #{tpu_custom_call.1} parent=55 // pred_fallthru
          _
      $region56: #{tpu_custom_call.1} parent=5 // pred_fallthru
        _
    $region6: #{tpu_custom_call.1} parent=1 // loop_footer
      %s22 = sadd.s32 1, %s18
    $region7: #{tpu_custom_call.1} parent=1 // loop_footer_branch
      %17 = sbr.rel target = $region3
    $region8: #{tpu_custom_call.1} parent=1 // loop_exit
      _
    %420 = vsyncpa [#allocation3], 1
    %s421 = scalar_lea.sflag [#allocation3], 1
    %422 = vsyncpa %s421, 1
    %423 = vsyncpa [#allocation6], 1
    %424 = vsyncpa [#allocation4], 1
    %s425 = scalar_lea.sflag [#allocation4], 1
    %426 = vsyncpa %s425, 1

// kernel: tpu_custom_call.1
$region0: #{tpu_custom_call.1}
  #allocation0 [shape = 'u32[]', space=smem, size = 0x4, offset = 0x4, fixed_abs, tag = 'smem constant byte address 0x4 - core index']
  #allocation1 [shape = 'u32[144,128]{1,0:T(1,128)}', space=vmem, size = 0x12000, scoped, tag = 'internal scratch']
  %s0 = inlined_call_operand.hbm [shape: f32[16,32], index: 0, kind: input, shape index: {}]
  %s1 = inlined_call_operand.hbm [shape: f32[32,256], index: 1, kind: input, shape index: {}]
  %s2 = inlined_call_operand.vmem [shape: f32[1,256], index: 2, kind: input, shape index: {}]
  %s3 = inlined_call_operand.vmem [shape: f32[1,128], index: 3, kind: input, shape index: {}]
  %s4 = inlined_call_operand.vmem [shape: f32[1,128], index: 4, kind: input, shape index: {}]
  %s5 = inlined_call_operand.hbm [shape: f32[16,128], index: 5, kind: output, shape index: {}]
  %s6 = sld [smem:[#allocation0]]
  $region61: #{tpu_custom_call.1} parent=0
    _
  %s8 = ssub.s32 1, %s6
  %s9 = scalar_select 0, %s8, %s6
  $region1: #{tpu_custom_call.1} parent=0
    #allocation2 [shape = 'u8[8192]{0}', space=vmem, size = 0x2000, scoped, tag = 'input window, operand 0']
    #allocation3 [shape = 's32[2]{0}', space=sflag, size = 0x8, scoped, tag = 'scoped memory for tpu_custom_call.1']
    #allocation4 [shape = 's32[2]{0}', space=sflag, size = 0x8, scoped, tag = 'scoped memory for tpu_custom_call.1']
    #allocation5 [shape = 'u8[32768]{0}', space=vmem, size = 0x8000, scoped, tag = 'input window, operand 1, single buffered']
    #allocation6 [shape = 's32[1]{0}', space=sflag, size = 0x4, scoped, tag = 'scoped memory for tpu_custom_call.1']
    #allocation7 [shape = 'u8[8192]{0}', space=vmem, size = 0x2000, scoped, tag = 'output window, operand 0']
    %10 = vsyncpa [#allocation3], 0
    %s11 = scalar_lea.sflag [#allocation3], 1
    %12 = vsyncpa %s11, 0
    %13 = vsyncpa [#allocation6], 0
    %14 = vsyncpa [#allocation4], 0
    %s15 = scalar_lea.sflag [#allocation4], 1
    %16 = vsyncpa %s15, 0
    loop: start=0, step=1, limit=4
    $region2: #{tpu_custom_call.1} parent=1 // loop_pre_header
      _
    $region3: #{tpu_custom_call.1} parent=1 // loop_header
      %s18 = sphi 0, %s22
      %p19 = scmp.ge.s32.totalorder %s18, 4
      %s28 = sphi 0, %s30
      %s31 = sphi 0, %s28
      %s32 = sphi 0, %s31
      %s48 = sphi 0, %s32
      %s52 = sphi 0, %s52
      %s54 = sphi 0, %s52
      %s55 = sphi 0, %s54
      %s69 = sphi 0, %s55
      %s73 = sphi 0, %s73
      %s75 = sphi 0, %s73
      %s76 = sphi 0, %s75
      %s90 = sphi 0, %s76
      %s94 = sphi 0, %s94
      %s96 = sphi 0, %s94
      %s97 = sphi 0, %s96
      %s111 = sphi 0, %s97
      %s115 = sphi 0, %s115
      %s117 = sphi 0, %s115
      %s118 = sphi 0, %s117
      %s132 = sphi 0, %s118
      %s138 = sphi 0, %s140
      %s141 = sphi 0, %s138
      %s142 = sphi 0, %s141
      %s158 = sphi 0, %s142
    $region4: #{tpu_custom_call.1} parent=1 // loop_header_branch
      %21 = sbr.rel (%p19) target = $region8
    $region5: #{tpu_custom_call.1} parent=1 // loop_body
      %s23 = ssub.s32 %s18, 1
      %s24 = ssub.s32 %s18, 2
      %s25 = sadd.s32 %s18, 1
      %s26 = ssub.s32 %s18, %s25
      %p27 = scmp.eq.s32.totalorder %s26, 0
      %s29 = sadd.s32 %s28, 1
      %s30 = scalar_select %p27, %s28, %s29
      %p33 = pneg %p27
      %p34 = scmp.eq.s32.totalorder %s18, 1
      %p35 = por %p33, %p34
      %p36 = scmp.ne.s32.totalorder %s28, %s31
      %p37 = scmp.eq.s32.totalorder %s18, 0
      %p38 = por %p36, %p37
      %p39 = scmp.ne.s32.totalorder %s28, %s31
      %p40 = scmp.eq.s32.totalorder %s23, 1
      %p41 = por %p39, %p40
      %p42 = scmp.ne.s32.totalorder %s31, %s32
      %p43 = scmp.eq.s32.totalorder %s23, 0
      %p44 = por %p42, %p43
      %p45 = scmp.ne.s32.totalorder %s31, %s32
      %p46 = scmp.eq.s32.totalorder %s24, 1
      %p47 = por %p45, %p46
      %p49 = scmp.ne.s32.totalorder %s32, %s48
      %p50 = scmp.eq.s32.totalorder %s24, 0
      %p51 = por %p49, %p50
      %s53 = sadd.s32 %s52, 1
      %p56 = scmp.eq.s32.totalorder %s18, 1
      %p57 = scmp.ne.s32.totalorder %s52, %s54
      %p58 = scmp.eq.s32.totalorder %s18, 0
      %p59 = por %p57, %p58
      %p60 = scmp.ne.s32.totalorder %s52, %s54
      %p61 = scmp.eq.s32.totalorder %s23, 1
      %p62 = por %p60, %p61
      %p63 = scmp.ne.s32.totalorder %s54, %s55
      %p64 = scmp.eq.s32.totalorder %s23, 0
      %p65 = por %p63, %p64
      %p66 = scmp.ne.s32.totalorder %s54, %s55
      %p67 = scmp.eq.s32.totalorder %s24, 1
      %p68 = por %p66, %p67
      %p70 = scmp.ne.s32.totalorder %s55, %s69
      %p71 = scmp.eq.s32.totalorder %s24, 0
      %p72 = por %p70, %p71
      %s74 = sadd.s32 %s73, 1
      %p77 = scmp.eq.s32.totalorder %s18, 1
      %p78 = scmp.ne.s32.totalorder %s73, %s75
      %p79 = scmp.eq.s32.totalorder %s18, 0
      %p80 = por %p78, %p79
      %p81 = scmp.ne.s32.totalorder %s73, %s75
      %p82 = scmp.eq.s32.totalorder %s23, 1
      %p83 = por %p81, %p82
      %p84 = scmp.ne.s32.totalorder %s75, %s76
      %p85 = scmp.eq.s32.totalorder %s23, 0
      %p86 = por %p84, %p85
      %p87 = scmp.ne.s32.totalorder %s75, %s76
      %p88 = scmp.eq.s32.totalorder %s24, 1
      %p89 = por %p87, %p88
      %p91 = scmp.ne.s32.totalorder %s76, %s90
      %p92 = scmp.eq.s32.totalorder %s24, 0
      %p93 = por %p91, %p92
      %s95 = sadd.s32 %s94, 1
      %p98 = scmp.eq.s32.totalorder %s18, 1
      %p99 = scmp.ne.s32.totalorder %s94, %s96
      %p100 = scmp.eq.s32.totalorder %s18, 0
      %p101 = por %p99, %p100
      %p102 = scmp.ne.s32.totalorder %s94, %s96
      %p103 = scmp.eq.s32.totalorder %s23, 1
      %p104 = por %p102, %p103
      %p105 = scmp.ne.s32.totalorder %s96, %s97
      %p106 = scmp.eq.s32.totalorder %s23, 0
      %p107 = por %p105, %p106
      %p108 = scmp.ne.s32.totalorder %s96, %s97
      %p109 = scmp.eq.s32.totalorder %s24, 1
      %p110 = por %p108, %p109
      %p112 = scmp.ne.s32.totalorder %s97, %s111
      %p113 = scmp.eq.s32.totalorder %s24, 0
      %p114 = por %p112, %p113
      %s116 = sadd.s32 %s115, 1
      %p119 = scmp.eq.s32.totalorder %s18, 1
      %p120 = scmp.ne.s32.totalorder %s115, %s117
      %p121 = scmp.eq.s32.totalorder %s18, 0
      %p122 = por %p120, %p121
      %p123 = scmp.ne.s32.totalorder %s115, %s117
      %p124 = scmp.eq.s32.totalorder %s23, 1
      %p125 = por %p123, %p124
      %p126 = scmp.ne.s32.totalorder %s117, %s118
      %p127 = scmp.eq.s32.totalorder %s23, 0
      %p128 = por %p126, %p127
      %p129 = scmp.ne.s32.totalorder %s117, %s118
      %p130 = scmp.eq.s32.totalorder %s24, 1
      %p131 = por %p129, %p130
      %p133 = scmp.ne.s32.totalorder %s118, %s132
      %p134 = scmp.eq.s32.totalorder %s24, 0
      %p135 = por %p133, %p134
      %s136 = ssub.s32 %s18, %s25
      %p137 = scmp.eq.s32.totalorder %s136, 0
      %s139 = sadd.s32 %s138, 1
      %s140 = scalar_select %p137, %s138, %s139
      %p143 = pneg %p137
      %p144 = scmp.eq.s32.totalorder %s18, 1
      %p145 = por %p143, %p144
      %p146 = scmp.ne.s32.totalorder %s138, %s141
      %p147 = scmp.eq.s32.totalorder %s18, 0
      %p148 = por %p146, %p147
      %p149 = scmp.ne.s32.totalorder %s138, %s141
      %p150 = scmp.eq.s32.totalorder %s23, 1
      %p151 = por %p149, %p150
      %p152 = scmp.ne.s32.totalorder %s141, %s142
      %p153 = scmp.eq.s32.totalorder %s23, 0
      %p154 = por %p152, %p153
      %p155 = scmp.ne.s32.totalorder %s141, %s142
      %p156 = scmp.eq.s32.totalorder %s24, 1
      %p157 = por %p155, %p156
      %p159 = scmp.ne.s32.totalorder %s142, %s158
      %p160 = scmp.eq.s32.totalorder %s24, 0
      %p161 = por %p159, %p160
      %p162 = scmp.le.s32.totalorder 1, %s18
      %p163 = scmp.lt.s32.totalorder %s18, 3
      %p164 = pnand %p162, %p163
      %p165 = pneg %p164
      // Predicated region
      $region9: #{tpu_custom_call.1} parent=5 // pred_check
        _
      $region10: #{tpu_custom_call.1} parent=5 // pred_check_branch
        %167 = sbr.rel (%p164) target = $region12
      $region11: #{tpu_custom_call.1} parent=5 // pred_region
        %s168 = ssub.s32 %s18, 1
        // Predicated region
        $region13: #{tpu_custom_call.1} parent=11 // pred_check
          %p169 = pneg %p65
        $region14: #{tpu_custom_call.1} parent=11 // pred_check_branch
          %171 = sbr.rel (%p169) target = $region16
        $region15: #{tpu_custom_call.1} parent=11 // pred_region
          %s173 = ssub.s32 1024, 1024
          %174 = vsyncadd [#allocation6], %s173
          %s175 = sshll.u32 [#allocation5], 4
          %s176 = int_to_ptr.vmem [resolvable:$true] %s175
          %181 = dma.hbm_to_vmem [thread:$0]  %s1, 1024, %s176, [#allocation6], 256, 256, 16
        $region16: #{tpu_custom_call.1} parent=11 // pred_fallthru
          _
        // Predicated region
        $region17: #{tpu_custom_call.1} parent=11 // pred_check
          %p182 = pneg %p86
        $region18: #{tpu_custom_call.1} parent=11 // pred_check_branch
          %184 = sbr.rel (%p182) target = $region20
        $region19: #{tpu_custom_call.1} parent=11 // pred_region
          _
        $region20: #{tpu_custom_call.1} parent=11 // pred_fallthru
          _
        // Predicated region
        $region21: #{tpu_custom_call.1} parent=11 // pred_check
          %p185 = pneg %p107
        $region22: #{tpu_custom_call.1} parent=11 // pred_check_branch
          %187 = sbr.rel (%p185) target = $region24
        $region23: #{tpu_custom_call.1} parent=11 // pred_region
          _
        $region24: #{tpu_custom_call.1} parent=11 // pred_fallthru
          _
        // Predicated region
        $region25: #{tpu_custom_call.1} parent=11 // pred_check
          %p188 = pneg %p128
        $region26: #{tpu_custom_call.1} parent=11 // pred_check_branch
          %190 = sbr.rel (%p188) target = $region28
        $region27: #{tpu_custom_call.1} parent=11 // pred_region
          _
        $region28: #{tpu_custom_call.1} parent=11 // pred_fallthru
          _
      $region12: #{tpu_custom_call.1} parent=5 // pred_fallthru
        _
      %p191 = scmp.lt.s32.totalorder %s18, 2
      // Predicated region
      $region29: #{tpu_custom_call.1} parent=5 // pred_check
        %p192 = pneg %p191
      $region30: #{tpu_custom_call.1} parent=5 // pred_check_branch
        %194 = sbr.rel (%p192) target = $region32
      $region31: #{tpu_custom_call.1} parent=5 // pred_region
        // Predicated region
        $region33: #{tpu_custom_call.1} parent=31 // pred_check
          %p195 = pneg %p38
        $region34: #{tpu_custom_call.1} parent=31 // pred_check_branch
          %197 = sbr.rel (%p195) target = $region36
        $region35: #{tpu_custom_call.1} parent=31 // pred_region
          %s198 = sand.u32 %s28, 1
          %s199 = scalar_lea.sflag [#allocation3], %s198
          %s200 = sand.u32 %s28, 1
          %s201 = smul.addr %s200, 8
          %s202 = scalar_lea.vmem [#allocation2], %s201
          %s204 = ssub.s32 128, 128
          %205 = vsyncadd %s199, %s204
          %s206 = smul.addr %s18, 128
          %s207 = scalar_lea.hbm %s0, %s206
          %s209 = sshll.u32 %s202, 4
          %s210 = int_to_ptr.vmem [resolvable:$true] %s209
          %212 = dma.hbm_to_vmem [thread:$0]  %s207, 128, %s210, %s199
        $region36: #{tpu_custom_call.1} parent=31 // pred_fallthru
          _
      $region32: #{tpu_custom_call.1} parent=5 // pred_fallthru
        _
      %p213 = scmp.le.s32.totalorder 1, %s18
      %p214 = scmp.lt.s32.totalorder %s18, 3
      %p215 = pnand %p213, %p214
      %p216 = pneg %p215
      // Predicated region
      $region37: #{tpu_custom_call.1} parent=5 // pred_check
        _
      $region38: #{tpu_custom_call.1} parent=5 // pred_check_branch
        %218 = sbr.rel (%p215) target = $region40
      $region39: #{tpu_custom_call.1} parent=5 // pred_region
        %s219 = ssub.s32 %s18, 1
        %s220 = sand.u32 %s31, 1
        %s221 = scalar_lea.sflag [#allocation3], %s220
        %s222 = sand.u32 %s31, 1
        %s223 = smul.addr %s222, 8
        %s224 = scalar_lea.vmem [#allocation2], %s223
        // Predicated region
        $region41: #{tpu_custom_call.1} parent=39 // pred_check
          %p225 = pneg %p44
        $region42: #{tpu_custom_call.1} parent=39 // pred_check_branch
          %227 = sbr.rel (%p225) target = $region44
        $region43: #{tpu_custom_call.1} parent=39 // pred_region
          %228 = dma.done %s221, 128
        $region44: #{tpu_custom_call.1} parent=39 // pred_fallthru
          _
        // Predicated region
        $region45: #{tpu_custom_call.1} parent=39 // pred_check
          %p229 = pneg %p65
        $region46: #{tpu_custom_call.1} parent=39 // pred_check_branch
          %231 = sbr.rel (%p229) target = $region48
        $region47: #{tpu_custom_call.1} parent=39 // pred_region
          %232 = dma.done [#allocation6], 1024
        $region48: #{tpu_custom_call.1} parent=39 // pred_fallthru
          _
        %s233 = sand.u32 %s31, 1
        %s234 = scalar_lea.sflag [#allocation3], %s233
        %s235 = sand.u32 %s31, 1
        %s236 = smul.addr %s235, 8
        %s237 = scalar_lea.vmem [#allocation2], %s236
        %p238 = pneg %p44
        %p239 = pneg %p41
        %p240 = pneg %p65
        %p241 = pneg %p62
        %p242 = pneg %p86
        %p243 = pneg %p83
        %p244 = pneg %p107
        %p245 = pneg %p104
        %p246 = pneg %p128
        %p247 = pneg %p125
        %p248 = pneg %p154
        %p249 = pneg %p151
        %s250 = sand.u32 %s141, 1
        %s251 = scalar_lea.sflag [#allocation4], %s250
        %s252 = sand.u32 %s141, 1
        %s253 = smul.addr %s252, 8
        %s254 = scalar_lea.vmem [#allocation7], %s253
        %v255 = vld [vmem:[%s224] sm:$0xff]
        %v256 = vld [vmem:[#allocation5] sm:$0xff]
        %v257 = vld [vmem:[#allocation5 + $0x8] sm:$0xff]
        %v258 = vld [vmem:[#allocation5 + $0x10] sm:$0xff]
        %v259 = vld [vmem:[#allocation5 + $0x18] sm:$0xff]
        %v260 = vld [vmem:[#allocation5 + $0x20] sm:$0xff]
        %v261 = vld [vmem:[#allocation5 + $0x28] sm:$0xff]
        %v262 = vld [vmem:[#allocation5 + $0x30] sm:$0xff]
        %v263 = vld [vmem:[#allocation5 + $0x38] sm:$0xff]
        %v264 = vld [vmem:[%s2] sm:$0x3]
        %v265 = vld [vmem:[%s3] sm:$0x1]
        %v266 = vld [vmem:[%s4] sm:$0x1]
        %v268 = vlaneseq
        %v269 = vshrl.u32 %v268, 7
        %v270 = vsub.s32 0, %v269
        %v271 = vrot.slane %v264, %v270
        %v272 = vlaneseq
        %v273 = vshrl.u32 %v272, 7
        %v274 = vsub.s32 1, %v273
        %v275 = vrot.slane %v264, %v274
        %vm278 = vcmask 261120
        %v280 = vsel %vm278, %v255, 0
        %282 = vmatprep.subr.mxu0 0.0
        %283 = vmatpush1.msra.mxu0 0.0
        %284 = vmatprep.subr.mxu0 0.0
        %285 = vmatpush1.msra.mxu0 0.0
        %286 = vmatprep.subr.mxu0 0.0
        %287 = vmatpush1.msra.mxu0 0.0
        %288 = vmatprep.subr.mxu0 0.0
        %289 = vmatpush1.msra.mxu0 0.0
        %290 = vmatprep.subr.mxu0 0.0
        %291 = vmatpush1.msra.mxu0 0.0
        %292 = vmatprep.subr.mxu0 0.0
        %293 = vmatpush1.msra.mxu0 0.0
        %294 = vmatprep.subr.mxu0 0.0
        %295 = vmatpush1.msra.mxu0 0.0
        %296 = vmatprep.subr.mxu0 0.0
        %297 = vmatpush1.msra.mxu0 0.0
        %298 = vmatprep.subr.mxu0 0.0
        %299 = vmatpush1.msra.mxu0 0.0
        %300 = vmatprep.subr.mxu0 0.0
        %301 = vmatpush1.msra.mxu0 0.0
        %302 = vmatprep.subr.mxu0 0.0
        %303 = vmatpush1.msra.mxu0 0.0
        %304 = vmatprep.subr.mxu0 0.0
        %305 = vmatpush1.msra.mxu0 0.0
        %306 = vmatprep.subr.mxu0 %v263
        %307 = vmatpush1.msra.mxu0 %v262
        %308 = vmatprep.subr.mxu0 %v261
        %309 = vmatpush1.msra.mxu0 %v260
        %310 = vmatprep.subr.mxu0 %v259
        %311 = vmatpush1.msra.mxu0 %v258
        %312 = vmatprep.subr.mxu0 %v257
        %313 = vmatpush1.msra.mxu0 %v256
        %314 = vmatprep.subr.mxu0 0.0
        %315 = vmatpush2.msra.mxu0 0.0
        %316 = vmatprep.subr.mxu0 0.0
        %317 = vmatpush2.msra.mxu0 0.0
        %318 = vmatprep.subr.mxu0 0.0
        %319 = vmatpush2.msra.mxu0 0.0
        %320 = vmatprep.subr.mxu0 0.0
        %321 = vmatpush2.msra.mxu0 0.0
        %322 = vmatprep.subr.mxu0 0.0
        %323 = vmatpush2.msra.mxu0 0.0
        %324 = vmatprep.subr.mxu0 0.0
        %325 = vmatpush2.msra.mxu0 0.0
        %326 = vmatprep.subr.mxu0 0.0
        %327 = vmatpush2.msra.mxu0 0.0
        %328 = vmatprep.subr.mxu0 0.0
        %329 = vmatpush2.msra.mxu0 0.0
        %330 = vmatprep.subr.mxu0 0.0
        %331 = vmatpush2.msra.mxu0 0.0
        %332 = vmatprep.subr.mxu0 0.0
        %333 = vmatpush2.msra.mxu0 0.0
        %334 = vmatprep.subr.mxu0 0.0
        %335 = vmatpush2.msra.mxu0 0.0
        %336 = vmatprep.subr.mxu0 0.0
        %337 = vmatpush2.msra.mxu0 0.0
        %338 = vmatprep.subr.mxu0 0.0
        %339 = vmatpush2.msra.mxu0 0.0
        %340 = vmatprep.subr.mxu0 0.0
        %341 = vmatpush2.msra.mxu0 0.0
        %342 = vmatprep.subr.mxu0 0.0
        %343 = vmatpush2.msra.mxu0 0.0
        %344 = vmatprep.subr.mxu0 0.0
        %345 = vmatpush2.msra.mxu0 0.0
        %346 = vmatprep.mubr.f32.mxu0 0.0
        %347 = vmatmul.mubr.f32.gmra.mxu0 %v280
        %v348 = vpop.f32.mrf.mxu0
        %v349 = vadd.f32 %v271, %v348
        %v350 = vpop.f32.mrf.mxu0
        %v351 = vadd.f32 %v275, %v350
        %352 = vdwg.mxu0
        %v353 = vmax.f32 %v349, 0.0
        %v354 = vmax.f32 %v351, 0.0
        %v355 = vmul.f32 %v353, %v354
        %356 = vadd.xlane.f32.xlu0 %v355
        %v357 = vpop.xlane.xlu0 %356
        %v358 = vmul.f32 %v357, 0.03125
        %v359 = vlaneseq
        %v360 = vand.u32 %v359, 127
        %vm361 = vcmp.lt.s32.totalorder %v360, 32
        %v362 = vsub.f32 %v355, %v358
        %v363 = vsel %vm361, 1, 0
        %vm364 = vcmp.eq.s32.totalorder %v363, 1
        %v365 = vsel %vm364, %v362, 0.0
        %v366 = vmul.f32 %v365, %v365
        %367 = vadd.xlane.f32.xlu0 %v366
        %v368 = vpop.xlane.xlu0 %367
        %v369 = vmul.f32 %v368, 0.03125
        %v370 = vadd.f32 %v369, 1e-05
        %v371 = vrsqrt.pop %v370
        %v372 = vmul.f32 %v365, %v371
        %v374 = vlaneseq
        %v375 = vshrl.u32 %v374, 7
        %v376 = vsub.s32 0, %v375
        %v377 = vrot.slane %v265, %v376
        %v379 = vmul.f32 %v372, %v377
        %v381 = vlaneseq
        %v382 = vshrl.u32 %v381, 7
        %v383 = vsub.s32 0, %v382
        %v384 = vrot.slane %v266, %v383
        %v386 = vadd.f32 %v379, %v384
        %387 = vst [vmem:[%s254] sm:$0xff] %v386
        %s388 = sand.u32 %s141, 1
        %s389 = scalar_lea.sflag [#allocation4], %s388
        %s390 = sand.u32 %s141, 1
        %s391 = smul.addr %s390, 8
        %s392 = scalar_lea.vmem [#allocation7], %s391
        // Predicated region
        $region49: #{tpu_custom_call.1} parent=39 // pred_check
          %p393 = pneg %p151
        $region50: #{tpu_custom_call.1} parent=39 // pred_check_branch
          %395 = sbr.rel (%p393) target = $region52
        $region51: #{tpu_custom_call.1} parent=39 // pred_region
          %s397 = ssub.s32 128, 128
          %398 = vsyncadd %s389, %s397
          %s399 = smul.addr %s23, 128
          %s400 = scalar_lea.hbm %s5, %s399
          %s402 = sshll.u32 %s392, 4
          %s403 = int_to_ptr.vmem [resolvable:$true] %s402
          %405 = dma.vmem_to_hbm [thread:$0]  %s403, 128, %s400, %s389
        $region52: #{tpu_custom_call.1} parent=39 // pred_fallthru
          _
      $region40: #{tpu_custom_call.1} parent=5 // pred_fallthru
        _
      %p406 = scmp.le.s32.totalorder 2, %s18
      // Predicated region
      $region53: #{tpu_custom_call.1} parent=5 // pred_check
        %p407 = pneg %p406
      $region54: #{tpu_custom_call.1} parent=5 // pred_check_branch
        %409 = sbr.rel (%p407) target = $region56
      $region55: #{tpu_custom_call.1} parent=5 // pred_region
        %s410 = ssub.s32 %s18, 2
        // Predicated region
        $region57: #{tpu_custom_call.1} parent=55 // pred_check
          %p411 = pneg %p157
        $region58: #{tpu_custom_call.1} parent=55 // pred_check_branch
          %413 = sbr.rel (%p411) target = $region60
        $region59: #{tpu_custom_call.1} parent=55 // pred_region
          %s414 = sand.u32 %s142, 1
          %s415 = scalar_lea.sflag [#allocation4], %s414
          %s416 = sand.u32 %s142, 1
          %s417 = smul.addr %s416, 8
          %s418 = scalar_lea.vmem [#allocation7], %s417
          %419 = dma.done %s415, 128
        $region60: #{tpu_custom_call.1} parent=55 // pred_fallthru
          _
      $region56: #{tpu_custom_call.1} parent=5 // pred_fallthru
        _
    $region6: #{tpu_custom_call.1} parent=1 // loop_footer
      %s22 = sadd.s32 1, %s18
    $region7: #{tpu_custom_call.1} parent=1 // loop_footer_branch
      %17 = sbr.rel target = $region3
    $region8: #{tpu_custom_call.1} parent=1 // loop_exit
      _
    %420 = vsyncpa [#allocation3], 1
    %s421 = scalar_lea.sflag [#allocation3], 1
    %422 = vsyncpa %s421, 1
    %423 = vsyncpa [#allocation6], 1
    %424 = vsyncpa [#allocation4], 1
    %s425 = scalar_lea.sflag [#allocation4], 1
    %426 = vsyncpa %s425, 1

</llo_original>
